<compile_context>
chip_gen: v6e
topology: v6e:2x2x1
jax: 0.10.0
libtpu: 0.0.40
codegen_flags: <defaults>
</compile_context>

<pallas_src>
import jax
import jax.numpy as jnp
from jax import lax
from jax.experimental import pallas as pl
from jax.experimental.pallas import tpu as pltpu


def _cdiv(a, b):
    return (a + b - 1) // b


def _as_2d(x):
    if x.ndim >= 2:
        return x.reshape(-1, x.shape[-1])   # free row-major collapse
    return x.reshape(-1, 1)


def pn2_loss(pred_translation, gt_translation, pred_size, gt_size,
             *, t_weight=1.0, s_weight=1.0, tile_rows=2048,
             use_jnp_fast_path=False):
    """Pallas implementation of Loss.forward (nn.L1Loss mean reduction).

    Returns {'loss', 't', 's'} as float32 scalars.
    """
    assert pred_translation.shape == gt_translation.shape
    assert pred_size.shape == gt_size.shape

    n_t = int(pred_translation.size)
    n_s = int(pred_size.size)

    if use_jnp_fast_path:
        # For the real PN2 shapes ((B, 3), modest B) plain XLA fusion beats the
        # pallas_call fixed overhead; opt-in so callers can pick it.
        lt = jnp.mean(jnp.abs(pred_translation.astype(jnp.float32) -
                              gt_translation.astype(jnp.float32)))
        ls = jnp.mean(jnp.abs(pred_size.astype(jnp.float32) -
                              gt_size.astype(jnp.float32)))
        return {'loss': t_weight * lt + s_weight * ls, 't': lt, 's': ls}

    pt = _as_2d(pred_translation)
    gt = _as_2d(gt_translation)
    ps = _as_2d(pred_size)
    gs = _as_2d(gt_size)
    # Both heads share the batch dimension in PN2; one grid covers both.
    assert pt.shape[0] == ps.shape[0], "heads must share the leading dim"

    rows = pt.shape[0]
    c_t = pt.shape[1]
    c_s = ps.shape[1]

    # Row tile: must be a multiple of 8 or the full extent (block constraint).
    max_tb = max(8, (int(tile_rows) // 8) * 8)
    if rows <= max_tb:
        tb = rows
        n_tiles = 1
    else:
        tb = max_tb
        n_tiles = _cdiv(rows, tb)

    folded = (tb % 8 == 0)          # fold (tb, C) -> (8, C) with VALU adds
    acc_rows = 8 if folded else tb  # tb==rows (single small tile) otherwise
    mask_tail = (n_tiles * tb != rows)

    def kernel(pt_ref, gtt_ref, ps_ref, gts_ref, sum_t_ref, sum_s_ref,
               acc_t_ref, acc_s_ref):
        t = pl.program_id(0)

        @pl.when(t == 0)
        def _():
            acc_t_ref[...] = jnp.zeros_like(acc_t_ref)
            acc_s_ref[...] = jnp.zeros_like(acc_s_ref)

        def accumulate(p_ref, g_ref, acc_ref):
            # Hot loop: VPU-only (upcast, sub, abs, select, vreg adds).
            diff = jnp.abs(p_ref[...].astype(jnp.float32) -
                           g_ref[...].astype(jnp.float32))
            if mask_tail:
                row = t * tb + lax.broadcasted_iota(jnp.int32, diff.shape, 0)
                diff = jnp.where(row < rows, diff, 0.0)
            if folded:
                # Free view (groups of 8 sublanes) + leading-axis sum => VALU.
                diff = diff.reshape(tb // 8, 8, diff.shape[-1]).sum(axis=0)
            acc_ref[...] += diff

        accumulate(pt_ref, gtt_ref, acc_t_ref)
        accumulate(ps_ref, gts_ref, acc_s_ref)

        # Epilogue: single cross-lane reduce per head (XLU only here).
        @pl.when(t == pl.num_programs(0) - 1)
        def _():
            sum_t_ref[0, 0] = jnp.sum(acc_t_ref[...])
            sum_s_ref[0, 0] = jnp.sum(acc_s_ref[...])

    scalar = jax.ShapeDtypeStruct((1, 1), jnp.float32)
    smem_out = pl.BlockSpec((1, 1), lambda t: (0, 0),
                            memory_space=pltpu.MemorySpace.SMEM)

    in_bytes = sum(int(x.size) * x.dtype.itemsize for x in (pt, gt, ps, gs))
    cost = pl.CostEstimate(flops=3 * (n_t + n_s), transcendentals=0,
                           bytes_accessed=in_bytes + 8)

    # Note: a v7x megacore split would add a leading size-2 "parallel" axis
    # over the tile range with per-core partial sums; not done here because the
    # kernel is per-step-overhead / HBM bound at realistic PN2 sizes.
    sum_t, sum_s = pl.pallas_call(
        kernel,
        out_shape=(scalar, scalar),
        grid_spec=pltpu.PrefetchScalarGridSpec(
            num_scalar_prefetch=0,
            grid=(n_tiles,),
            in_specs=[
                pl.BlockSpec((tb, c_t), lambda t: (t, 0)),
                pl.BlockSpec((tb, c_t), lambda t: (t, 0)),
                pl.BlockSpec((tb, c_s), lambda t: (t, 0)),
                pl.BlockSpec((tb, c_s), lambda t: (t, 0)),
            ],
            out_specs=(smem_out, smem_out),
            scratch_shapes=[pltpu.VMEM((acc_rows, c_t), jnp.float32),
                            pltpu.VMEM((acc_rows, c_s), jnp.float32)]),
        compiler_params=pltpu.CompilerParams(
            dimension_semantics=("arbitrary",)),
        cost_estimate=cost,
    )(pt, gt, ps, gs)

    # Mean reduction (true, unmasked element counts) + weighted combine: three
    # scalar ops in the wrapper.
    loss_t = sum_t[0, 0] * (1.0 / n_t)
    loss_s = sum_s[0, 0] * (1.0 / n_s)
    loss = t_weight * loss_t + s_weight * loss_s
    return {'loss': loss, 't': loss_t, 's': loss_s}


if __name__ == "__main__":
    key = jax.random.PRNGKey(0)
    k1, k2, k3, k4 = jax.random.split(key, 4)

    # Small shapes consistent with the module: (B, 3) translation / size heads.
    B = 16
    pred_t = jax.random.normal(k1, (B, 3), dtype=jnp.float32)
    pred_s = jax.random.normal(k2, (B, 3), dtype=jnp.float32)
    gt_t = jax.random.normal(k3, (B, 3), dtype=jnp.float32)
    gt_s = jax.random.normal(k4, (B, 3), dtype=jnp.float32)

    t_weight, s_weight = 1.0, 0.5
    out = jax.block_until_ready(
        pn2_loss(pred_t, gt_t, pred_s, gt_s,
                 t_weight=t_weight, s_weight=s_weight))

    ref_t = jnp.mean(jnp.abs(pred_t - gt_t))
    ref_s = jnp.mean(jnp.abs(pred_s - gt_s))
    ref_loss = t_weight * ref_t + s_weight * ref_s
    assert jnp.allclose(out['t'], ref_t, rtol=1e-5, atol=1e-6)
    assert jnp.allclose(out['s'], ref_s, rtol=1e-5, atol=1e-6)
    assert jnp.allclose(out['loss'], ref_loss, rtol=1e-5, atol=1e-6)

    # Check 2: multi-tile grid with a masked partial tail tile
    # (B=50, tile_rows=8 -> 7 tiles, last tile has 2 valid rows).
    kk = jax.random.split(jax.random.PRNGKey(1), 4)
    B2 = 50
    p2t = jax.random.normal(kk[0], (B2, 3), dtype=jnp.float32)
    p2s = jax.random.normal(kk[1], (B2, 3), dtype=jnp.float32)
    g2t = jax.random.normal(kk[2], (B2, 3), dtype=jnp.float32)
    g2s = jax.random.normal(kk[3], (B2, 3), dtype=jnp.float32)
    out2 = jax.block_until_ready(
        pn2_loss(p2t, g2t, p2s, g2s, t_weight=0.7, s_weight=1.3, tile_rows=8))
    r2t = jnp.mean(jnp.abs(p2t - g2t))
    r2s = jnp.mean(jnp.abs(p2s - g2s))
    assert jnp.allclose(out2['t'], r2t, rtol=1e-5, atol=1e-6)
    assert jnp.allclose(out2['s'], r2s, rtol=1e-5, atol=1e-6)
    assert jnp.allclose(out2['loss'], 0.7 * r2t + 1.3 * r2s,
                        rtol=1e-5, atol=1e-6)

    # Check 3: bf16 inputs stay bf16 through the DMA, upcast in-kernel.
    p3t = p2t.astype(jnp.bfloat16)
    g3t = g2t.astype(jnp.bfloat16)
    p3s = p2s.astype(jnp.bfloat16)
    g3s = g2s.astype(jnp.bfloat16)
    out3 = jax.block_until_ready(pn2_loss(p3t, g3t, p3s, g3s))
    r3t = jnp.mean(jnp.abs(p3t.astype(jnp.float32) - g3t.astype(jnp.float32)))
    r3s = jnp.mean(jnp.abs(p3s.astype(jnp.float32) - g3s.astype(jnp.float32)))
    assert jnp.allclose(out3['t'], r3t, rtol=1e-5, atol=1e-6)
    assert jnp.allclose(out3['s'], r3s, rtol=1e-5, atol=1e-6)
    assert jnp.allclose(out3['loss'], r3t + r3s, rtol=1e-5, atol=1e-6)

    print("KERNEL_OK")
</pallas_src>

<mosaic_0001>
module attributes {stable_mosaic.version = 11 : i64} {
  func.func @kernel(%arg0: i32, %arg1: memref<16x3xf32, #tpu.memory_space<vmem>>, %arg2: memref<16x3xf32, #tpu.memory_space<vmem>>, %arg3: memref<16x3xf32, #tpu.memory_space<vmem>>, %arg4: memref<16x3xf32, #tpu.memory_space<vmem>>, %arg5: memref<1x1xf32, #tpu.memory_space<smem>>, %arg6: memref<1x1xf32, #tpu.memory_space<smem>>, %arg7: memref<8x3xf32, #tpu.memory_space<vmem>>, %arg8: memref<8x3xf32, #tpu.memory_space<vmem>>) attributes {dimension_semantics = [#tpu.dimension_semantics<arbitrary>], iteration_bounds = array<i64: 1>, scalar_prefetch = 0 : i64, scratch_operands = 2 : i64, tpu.core_type = #tpu.core_type<tc>, window_params = [{transform_indices = @transform_0, window_bounds = array<i64: 16, 3>}, {transform_indices = @transform_1, window_bounds = array<i64: 16, 3>}, {transform_indices = @transform_2, window_bounds = array<i64: 16, 3>}, {transform_indices = @transform_3, window_bounds = array<i64: 16, 3>}, {transform_indices = @transform_4, window_bounds = array<i64: 1, 1>}, {transform_indices = @transform_5, window_bounds = array<i64: 1, 1>}]} {
    %c0_i32 = arith.constant 0 : i32
    %0 = arith.cmpi eq, %arg0, %c0_i32 : i32
    %1 = arith.extui %0 : i1 to i32
    %c0_i32_0 = arith.constant 0 : i32
    %2 = arith.cmpi ne, %1, %c0_i32_0 : i32
    scf.if %2 {
      %cst_19 = arith.constant 0.000000e+00 : f32
      %24 = vector.broadcast %cst_19 : f32 to vector<8x3xf32>
      %c0_20 = arith.constant 0 : index
      %c0_21 = arith.constant 0 : index
      %25 = vector.load %arg7[%c0_20, %c0_21] : memref<8x3xf32, #tpu.memory_space<vmem>>, vector<8x3xf32>
      tpu.vector_store %arg7[%c0_20, %c0_21], %24 {strides = array<i32>} : memref<8x3xf32, #tpu.memory_space<vmem>>, vector<8x3xf32>,
      %cst_22 = arith.constant 0.000000e+00 : f32
      %26 = vector.broadcast %cst_22 : f32 to vector<8x3xf32>
      %c0_23 = arith.constant 0 : index
      %c0_24 = arith.constant 0 : index
      %27 = vector.load %arg8[%c0_23, %c0_24] : memref<8x3xf32, #tpu.memory_space<vmem>>, vector<8x3xf32>
      tpu.vector_store %arg8[%c0_23, %c0_24], %26 {strides = array<i32>} : memref<8x3xf32, #tpu.memory_space<vmem>>, vector<8x3xf32>,
    } else {
    }
    %c0 = arith.constant 0 : index
    %c0_1 = arith.constant 0 : index
    %3 = vector.load %arg1[%c0, %c0_1] : memref<16x3xf32, #tpu.memory_space<vmem>>, vector<16x3xf32>
    %c0_2 = arith.constant 0 : index
    %c0_3 = arith.constant 0 : index
    %4 = vector.load %arg2[%c0_2, %c0_3] : memref<16x3xf32, #tpu.memory_space<vmem>>, vector<16x3xf32>
    %5 = arith.subf %3, %4 : vector<16x3xf32>
    %6 = math.absf %5 : vector<16x3xf32>
    %7 = vector.shape_cast %6 : vector<16x3xf32> to vector<2x8x3xf32>
    %cst = arith.constant dense<0.000000e+00> : vector<8x3xf32>
    %8 = vector.multi_reduction <add>, %7, %cst [0] : vector<2x8x3xf32> to vector<8x3xf32>
    %c0_4 = arith.constant 0 : index
    %c0_5 = arith.constant 0 : index
    %9 = vector.load %arg7[%c0_4, %c0_5] : memref<8x3xf32, #tpu.memory_space<vmem>>, vector<8x3xf32>
    %10 = arith.addf %9, %8 : vector<8x3xf32>
    %c0_6 = arith.constant 0 : index
    %c0_7 = arith.constant 0 : index
    %11 = vector.load %arg7[%c0_6, %c0_7] : memref<8x3xf32, #tpu.memory_space<vmem>>, vector<8x3xf32>
    tpu.vector_store %arg7[%c0_6, %c0_7], %10 {strides = array<i32>} : memref<8x3xf32, #tpu.memory_space<vmem>>, vector<8x3xf32>,
    %c0_8 = arith.constant 0 : index
    %c0_9 = arith.constant 0 : index
    %12 = vector.load %arg3[%c0_8, %c0_9] : memref<16x3xf32, #tpu.memory_space<vmem>>, vector<16x3xf32>
    %c0_10 = arith.constant 0 : index
    %c0_11 = arith.constant 0 : index
    %13 = vector.load %arg4[%c0_10, %c0_11] : memref<16x3xf32, #tpu.memory_space<vmem>>, vector<16x3xf32>
    %14 = arith.subf %12, %13 : vector<16x3xf32>
    %15 = math.absf %14 : vector<16x3xf32>
    %16 = vector.shape_cast %15 : vector<16x3xf32> to vector<2x8x3xf32>
    %cst_12 = arith.constant dense<0.000000e+00> : vector<8x3xf32>
    %17 = vector.multi_reduction <add>, %16, %cst_12 [0] : vector<2x8x3xf32> to vector<8x3xf32>
    %c0_13 = arith.constant 0 : index
    %c0_14 = arith.constant 0 : index
    %18 = vector.load %arg8[%c0_13, %c0_14] : memref<8x3xf32, #tpu.memory_space<vmem>>, vector<8x3xf32>
    %19 = arith.addf %18, %17 : vector<8x3xf32>
    %c0_15 = arith.constant 0 : index
    %c0_16 = arith.constant 0 : index
    %20 = vector.load %arg8[%c0_15, %c0_16] : memref<8x3xf32, #tpu.memory_space<vmem>>, vector<8x3xf32>
    tpu.vector_store %arg8[%c0_15, %c0_16], %19 {strides = array<i32>} : memref<8x3xf32, #tpu.memory_space<vmem>>, vector<8x3xf32>,
    %c0_i32_17 = arith.constant 0 : i32
    %21 = arith.cmpi eq, %arg0, %c0_i32_17 : i32
    %22 = arith.extui %21 : i1 to i32
    %c0_i32_18 = arith.constant 0 : i32
    %23 = arith.cmpi ne, %22, %c0_i32_18 : i32
    scf.if %23 {
      %c0_19 = arith.constant 0 : index
      %c0_20 = arith.constant 0 : index
      %24 = vector.load %arg7[%c0_19, %c0_20] : memref<8x3xf32, #tpu.memory_space<vmem>>, vector<8x3xf32>
      %25 = vector.shape_cast %24 : vector<8x3xf32> to vector<1x8x3xf32>
      %cst_21 = arith.constant dense<0.000000e+00> : vector<1xf32>
      %26 = vector.multi_reduction <add>, %25, %cst_21 [1, 2] : vector<1x8x3xf32> to vector<1xf32>
      %27 = vector.shape_cast %26 : vector<1xf32> to vector<1x1x1xf32>
      %28 = vector.extract %27[0, 0, 0] : f32 from vector<1x1x1xf32>
      %c0_22 = arith.constant 0 : index
      %c0_23 = arith.constant 0 : index
      %29 = memref.load %arg5[%c0_22, %c0_23] : memref<1x1xf32, #tpu.memory_space<smem>>
      memref.store %28, %arg5[%c0_22, %c0_23] : memref<1x1xf32, #tpu.memory_space<smem>>
      %c0_24 = arith.constant 0 : index
      %c0_25 = arith.constant 0 : index
      %30 = vector.load %arg8[%c0_24, %c0_25] : memref<8x3xf32, #tpu.memory_space<vmem>>, vector<8x3xf32>
      %31 = vector.shape_cast %30 : vector<8x3xf32> to vector<1x8x3xf32>
      %cst_26 = arith.constant dense<0.000000e+00> : vector<1xf32>
      %32 = vector.multi_reduction <add>, %31, %cst_26 [1, 2] : vector<1x8x3xf32> to vector<1xf32>
      %33 = vector.shape_cast %32 : vector<1xf32> to vector<1x1x1xf32>
      %34 = vector.extract %33[0, 0, 0] : f32 from vector<1x1x1xf32>
      %c0_27 = arith.constant 0 : index
      %c0_28 = arith.constant 0 : index
      %35 = memref.load %arg6[%c0_27, %c0_28] : memref<1x1xf32, #tpu.memory_space<smem>>
      memref.store %34, %arg6[%c0_27, %c0_28] : memref<1x1xf32, #tpu.memory_space<smem>>
    } else {
    }
    return
  }
  func.func @transform_0(%arg0: i32) -> (i32, i32) {
    %c0_i32 = arith.constant 0 : i32
    %c0_i32_0 = arith.constant 0 : i32
    return %arg0, %c0_i32 : i32, i32
  }
  func.func @transform_1(%arg0: i32) -> (i32, i32) {
    %c0_i32 = arith.constant 0 : i32
    %c0_i32_0 = arith.constant 0 : i32
    return %arg0, %c0_i32 : i32, i32
  }
  func.func @transform_2(%arg0: i32) -> (i32, i32) {
    %c0_i32 = arith.constant 0 : i32
    %c0_i32_0 = arith.constant 0 : i32
    return %arg0, %c0_i32 : i32, i32
  }
  func.func @transform_3(%arg0: i32) -> (i32, i32) {
    %c0_i32 = arith.constant 0 : i32
    %c0_i32_0 = arith.constant 0 : i32
    return %arg0, %c0_i32 : i32, i32
  }
  func.func @transform_4(%arg0: i32) -> (i32, i32) {
    %c0_i32 = arith.constant 0 : i32
    %c0_i32_0 = arith.constant 0 : i32
    %c0_i32_1 = arith.constant 0 : i32
    return %c0_i32, %c0_i32_0 : i32, i32
  }
  func.func @transform_5(%arg0: i32) -> (i32, i32) {
    %c0_i32 = arith.constant 0 : i32
    %c0_i32_0 = arith.constant 0 : i32
    %c0_i32_1 = arith.constant 0 : i32
    return %c0_i32, %c0_i32_0 : i32, i32
  }
}

</mosaic_0001>

<llo_original>
// kernel: tpu_custom_call.1
$region0: #{tpu_custom_call.1}
  #allocation0 [shape = 'u32[]', space=smem, size = 0x4, offset = 0x4, fixed_abs, tag = 'smem constant byte address 0x4 - core index']
  #allocation1 [shape = 'u32[144,128]{1,0:T(1,128)}', space=vmem, size = 0x12000, scoped, tag = 'internal scratch']
  #allocation2 [shape = 'f32[8,3]{1,0:T(8,128)}', space=vmem, size = 0x1000, scoped, tag = 'scratch operand']
  #allocation3 [shape = 'f32[8,3]{1,0:T(8,128)}', space=vmem, size = 0x1000, scoped, tag = 'scratch operand']
  %s0 = inlined_call_operand.vmem [shape: f32[16,3], index: 0, kind: input, shape index: {}]
  %s1 = inlined_call_operand.vmem [shape: f32[16,3], index: 1, kind: input, shape index: {}]
  %s2 = inlined_call_operand.vmem [shape: f32[16,3], index: 2, kind: input, shape index: {}]
  %s3 = inlined_call_operand.vmem [shape: f32[16,3], index: 3, kind: input, shape index: {}]
  %s4 = inlined_call_operand.hbm [shape: f32[1,1], index: 4, kind: output, shape index: {0}]
  %s5 = inlined_call_operand.hbm [shape: f32[1,1], index: 5, kind: output, shape index: {1}]
  %6 = xla_tuple %s4, %s5
  %s7 = sld [smem:[#allocation0]]
  $region42: #{tpu_custom_call.1} parent=0
    _
  %s9 = ssub.s32 1, %s7
  %s10 = scalar_select 0, %s9, %s7
  $region1: #{tpu_custom_call.1} parent=0
    #allocation4 [shape = 'u8[512]{0}', space=smem, size = 0x200, scoped, tag = 'output window, operand 0, single buffered']
    #allocation5 [shape = 's32[1]{0}', space=sflag, size = 0x4, scoped, tag = 'scoped memory for tpu_custom_call.1']
    #allocation6 [shape = 'u8[512]{0}', space=smem, size = 0x200, scoped, tag = 'output window, operand 1, single buffered']
    #allocation7 [shape = 's32[1]{0}', space=sflag, size = 0x4, scoped, tag = 'scoped memory for tpu_custom_call.1']
    %11 = vsyncpa [#allocation5], 0
    %12 = vsyncpa [#allocation7], 0
    // Predicated region
    $region2: #{tpu_custom_call.1} parent=1 // pred_check
      _
    $region3: #{tpu_custom_call.1} parent=1 // pred_check_branch
      %14 = sbr.rel (0) target = $region5
    $region4: #{tpu_custom_call.1} parent=1 // pred_region
      _
    $region5: #{tpu_custom_call.1} parent=1 // pred_fallthru
      _
    // Predicated region
    $region6: #{tpu_custom_call.1} parent=1 // pred_check
      _
    $region7: #{tpu_custom_call.1} parent=1 // pred_check_branch
      %16 = sbr.rel (0) target = $region9
    $region8: #{tpu_custom_call.1} parent=1 // pred_region
      _
    $region9: #{tpu_custom_call.1} parent=1 // pred_fallthru
      _
    // Predicated region
    $region10: #{tpu_custom_call.1} parent=1 // pred_check
      _
    $region11: #{tpu_custom_call.1} parent=1 // pred_check_branch
      %18 = sbr.rel (0) target = $region13
    $region12: #{tpu_custom_call.1} parent=1 // pred_region
      _
    $region13: #{tpu_custom_call.1} parent=1 // pred_fallthru
      _
    // Predicated region
    $region14: #{tpu_custom_call.1} parent=1 // pred_check
      _
    $region15: #{tpu_custom_call.1} parent=1 // pred_check_branch
      %20 = sbr.rel (0) target = $region17
    $region16: #{tpu_custom_call.1} parent=1 // pred_region
      _
    $region17: #{tpu_custom_call.1} parent=1 // pred_fallthru
      _
    %p21 = scmp.eq.s32.totalorder 0, 0
    // Predicated region
    $region18: #{tpu_custom_call.1} parent=1 // pred_check
      %p22 = pneg %p21
    $region19: #{tpu_custom_call.1} parent=1 // pred_check_branch
      %24 = sbr.rel (%p22) target = $region21
    $region20: #{tpu_custom_call.1} parent=1 // pred_region
      %vm25 = vcmask 23552
      %26 = vst.msk [vmem:[#allocation2] sm:$0xff] %vm25, 0.0
      %27 = vst.msk [vmem:[#allocation3] sm:$0xff] %vm25, 0.0
    $region21: #{tpu_custom_call.1} parent=1 // pred_fallthru
      _
    %v28 = vld [vmem:[%s0] sm:$0xff]
    %v29 = vld [vmem:[%s0 + $0x8] sm:$0xff]
    %v30 = vld [vmem:[%s1] sm:$0xff]
    %v31 = vld [vmem:[%s1 + $0x8] sm:$0xff]
    %v32 = vsub.f32 %v28, %v30
    %v33 = vsub.f32 %v29, %v31
    %v34 = vand.u32 2147483647, %v32
    %v35 = vand.u32 2147483647, %v33
    %vm36 = vcmask 23552
    %v37 = vsel %vm36, %v34, 0.0
    %v38 = vsel %vm36, %v35, 0.0
    %v39 = vadd.f32 %v37, %v38
    %v40 = vld [vmem:[#allocation2] sm:$0xff]
    %v41 = vadd.f32 %v40, %v39
    %42 = vst.msk [vmem:[#allocation2] sm:$0xff] %vm36, %v41
    %v43 = vld [vmem:[%s2] sm:$0xff]
    %v44 = vld [vmem:[%s2 + $0x8] sm:$0xff]
    %v45 = vld [vmem:[%s3] sm:$0xff]
    %v46 = vld [vmem:[%s3 + $0x8] sm:$0xff]
    %v47 = vsub.f32 %v43, %v45
    %v48 = vsub.f32 %v44, %v46
    %v49 = vand.u32 2147483647, %v47
    %v50 = vand.u32 2147483647, %v48
    %v51 = vsel %vm36, %v49, 0.0
    %v52 = vsel %vm36, %v50, 0.0
    %v53 = vadd.f32 %v51, %v52
    %v54 = vld [vmem:[#allocation3] sm:$0xff]
    %v55 = vadd.f32 %v54, %v53
    %56 = vst.msk [vmem:[#allocation3] sm:$0xff] %vm36, %v55
    // Predicated region
    $region22: #{tpu_custom_call.1} parent=1 // pred_check
      %p57 = pneg %p21
    $region23: #{tpu_custom_call.1} parent=1 // pred_check_branch
      %59 = sbr.rel (%p57) target = $region25
    $region24: #{tpu_custom_call.1} parent=1 // pred_region
      %v60 = vld [vmem:[#allocation2] sm:$0xff]
      %v61 = vsel %vm36, %v60, 0.0
      %62 = vadd.xlane.f32.xlu0 %v61
      %v63 = vpop.xlane.xlu0 %62
      %v64 = vrot.slane %v63, 4
      %v65 = vadd.f32 %v63, %v64
      %v66 = vrot.slane %v65, 2
      %v67 = vadd.f32 %v65, %v66
      %v68 = vrot.slane %v67, 1
      %v69 = vadd.f32 %v67, %v68
      %s70 = vtos %v69
      %s71 = scalar_lea.smem [#allocation4], 0
      %72 = sst [smem:[%s71]] %s70
      %v73 = vld [vmem:[#allocation3] sm:$0xff]
      %v74 = vsel %vm36, %v73, 0.0
      %75 = vadd.xlane.f32.xlu0 %v74
      %v76 = vpop.xlane.xlu0 %75
      %v77 = vrot.slane %v76, 4
      %v78 = vadd.f32 %v76, %v77
      %v79 = vrot.slane %v78, 2
      %v80 = vadd.f32 %v78, %v79
      %v81 = vrot.slane %v80, 1
      %v82 = vadd.f32 %v80, %v81
      %s83 = vtos %v82
      %s84 = scalar_lea.smem [#allocation6], 0
      %85 = sst [smem:[%s84]] %s83
    $region25: #{tpu_custom_call.1} parent=1 // pred_fallthru
      _
    // Predicated region
    $region26: #{tpu_custom_call.1} parent=1 // pred_check
      _
    $region27: #{tpu_custom_call.1} parent=1 // pred_check_branch
      %87 = sbr.rel (0) target = $region29
    $region28: #{tpu_custom_call.1} parent=1 // pred_region
      %s89 = ssub.s32 16, 16
      %90 = vsyncadd [#allocation5], %s89
      %93 = dma.smem_to_hbm [#allocation4], 16, %s4, [#allocation5]
    $region29: #{tpu_custom_call.1} parent=1 // pred_fallthru
      _
    // Predicated region
    $region30: #{tpu_custom_call.1} parent=1 // pred_check
      _
    $region31: #{tpu_custom_call.1} parent=1 // pred_check_branch
      %95 = sbr.rel (0) target = $region33
    $region32: #{tpu_custom_call.1} parent=1 // pred_region
      %s97 = ssub.s32 16, 16
      %98 = vsyncadd [#allocation7], %s97
      %101 = dma.smem_to_hbm [#allocation6], 16, %s5, [#allocation7]
    $region33: #{tpu_custom_call.1} parent=1 // pred_fallthru
      _
    // Predicated region
    $region34: #{tpu_custom_call.1} parent=1 // pred_check
      _
    $region35: #{tpu_custom_call.1} parent=1 // pred_check_branch
      %103 = sbr.rel (0) target = $region37
    $region36: #{tpu_custom_call.1} parent=1 // pred_region
      %104 = dma.done [#allocation5], 16
    $region37: #{tpu_custom_call.1} parent=1 // pred_fallthru
      _
    // Predicated region
    $region38: #{tpu_custom_call.1} parent=1 // pred_check
      _
    $region39: #{tpu_custom_call.1} parent=1 // pred_check_branch
      %106 = sbr.rel (0) target = $region41
    $region40: #{tpu_custom_call.1} parent=1 // pred_region
      %107 = dma.done [#allocation7], 16
    $region41: #{tpu_custom_call.1} parent=1 // pred_fallthru
      _
    %108 = sfence
    %109 = vsyncpa [#allocation5], 1
    %110 = vsyncpa [#allocation7], 1

</llo_original>
